<compile_context>
chip_gen: v6e
topology: v6e:2x2x1
jax: 0.10.0
libtpu: 0.0.40
codegen_flags: <defaults>
</compile_context>

<pallas_src>
import jax
import jax.numpy as jnp
from jax.experimental import pallas as pl
from jax.experimental.pallas import tpu as pltpu


# ----------------------------- kernels --------------------------------------

def _attn_body(x_ref, w_ref, o_ref, acc_ref, m):
    # x_ref: (TB, TS, H)  w_ref: (1, H)  o_ref: (TB, H)  acc_ref: VMEM (TB, H) f32
    # m:     (TB, TS, 1) f32 values, or None (no-mask variant)
    s = pl.program_id(1)

    @pl.when(s == 0)
    def _init():
        acc_ref[...] = jnp.zeros_like(acc_ref)

    x = x_ref[...].astype(jnp.float32)                 # (TB, TS, H)
    w = w_ref[...].astype(jnp.float32)                 # (1, H)

    # alpha[b, t] = sum_h x[b, t, h] * w[h]   (Linear(H -> 1), no bias)
    scores = jnp.sum(x * w[None, :, :], axis=-1, keepdims=True)   # (TB, TS, 1)
    gate = jax.nn.sigmoid(scores)                                  # (TB, TS, 1)
    if m is not None:
        gate = gate * m                                            # same layout

    # partial output[b, h] = sum_t gate[b, t] * x[b, t, h]
    acc_ref[...] += jnp.sum(gate * x, axis=1)                      # (TB, H) f32

    @pl.when(s == pl.num_programs(1) - 1)
    def _finalize():
        o_ref[...] = acc_ref[...].astype(o_ref.dtype)


def _attn_kernel_masked(x_ref, w_ref, m_ref, o_ref, acc_ref):
    _attn_body(x_ref, w_ref, o_ref, acc_ref, m=m_ref[...].astype(jnp.float32))


def _attn_kernel_nomask(x_ref, w_ref, o_ref, acc_ref):
    _attn_body(x_ref, w_ref, o_ref, acc_ref, m=None)


# ----------------------------- wrapper ---------------------------------------

def _round_up(x, m):
    return ((x + m - 1) // m) * m


def _choose_tiles(B, S, H, budget_elems):
    """Pick (TB, TS) so one input block is ~<= budget_elems f32 elements
    (double-buffered input <= ~2x that in VMEM)."""
    # Batch tile: >= 8 when possible so (TB, H) output stores are sublane-dense.
    tb = B if B <= 8 else 8

    # Sequence tile: whole S if it fits, else a multiple of 8.
    if tb * S * H <= budget_elems:
        ts = S
    else:
        ts = max(8, (budget_elems // (tb * H)) // 8 * 8)

    # Grow the batch tile while the budget allows (bigger DMA per grid step).
    if B > 8:
        while tb * 2 * ts * H <= budget_elems and tb * 2 <= _round_up(B, 8):
            tb *= 2
    return tb, ts


def self_attention_layer2_forward(inputs, weight_row, mask=None, *,
                                  block_elems=2 * 1024 * 1024):
    """
    inputs:     (B, S, H) float32
    weight_row: (1, H) or (H,) float32 -- the Linear(H, 1, bias=False) weight
    mask:       optional (B, S) float (or bool/int) mask
    returns:    (B, H) float32
    """
    if inputs.ndim != 3:
        raise ValueError('! Wrong dimemsion of the inputs parameters.')
    B, S, H = inputs.shape
    weight_row = weight_row.reshape(1, H).astype(inputs.dtype)

    tb, ts = _choose_tiles(B, S, H, block_elems)
    Bp = _round_up(B, tb)
    Sp = _round_up(S, ts)

    x = inputs
    if (Bp, Sp) != (B, S):
        # Zero padding is exact: padded rows contribute gate * 0 = 0.
        x = jnp.pad(x, ((0, Bp - B), (0, Sp - S), (0, 0)))

    grid = (Bp // tb, Sp // ts)
    x_spec = pl.BlockSpec((tb, ts, H), lambda b, s: (b, s, 0))
    w_spec = pl.BlockSpec((1, H), lambda b, s: (0, 0))
    out_spec = pl.BlockSpec((tb, H), lambda b, s: (b, 0))   # resident across s
    scratch = [pltpu.VMEM((tb, H), jnp.float32)]
    cparams = pltpu.CompilerParams(
        dimension_semantics=("parallel", "arbitrary"),
        vmem_limit_bytes=48 * 1024 * 1024,
    )
    out_shape = jax.ShapeDtypeStruct((Bp, H), inputs.dtype)

    if mask is None:
        out = pl.pallas_call(
            _attn_kernel_nomask,
            out_shape=out_shape,
            grid_spec=pltpu.PrefetchScalarGridSpec(
                num_scalar_prefetch=0,
                grid=grid,
                in_specs=[x_spec, w_spec],
                out_specs=out_spec,
                scratch_shapes=scratch),
            compiler_params=cparams,
        )(x, weight_row)
    else:
        # Feed the mask already in the gate's (.., S-on-sublanes, 1) layout.
        m = mask.astype(inputs.dtype)[:, :, None]            # (B, S, 1)
        if (Bp, Sp) != (B, S):
            m = jnp.pad(m, ((0, Bp - B), (0, Sp - S), (0, 0)))
        m_spec = pl.BlockSpec((tb, ts, 1), lambda b, s: (b, s, 0))
        out = pl.pallas_call(
            _attn_kernel_masked,
            out_shape=out_shape,
            grid_spec=pltpu.PrefetchScalarGridSpec(
                num_scalar_prefetch=0,
                grid=grid,
                in_specs=[x_spec, w_spec, m_spec],
                out_specs=out_spec,
                scratch_shapes=scratch),
            compiler_params=cparams,
        )(x, weight_row, m)

    return out[:B] if Bp != B else out


# ----------------------------- reference & test ------------------------------

def _reference(inputs, weight_row, mask=None):
    alpha = jnp.einsum('bsh,h->bs', inputs, weight_row.reshape(-1))   # (B, S)
    gate = jax.nn.sigmoid(alpha)
    if mask is not None:
        gate = gate * mask.astype(inputs.dtype)
    return jnp.einsum('bs,bsh->bh', gate, inputs)                      # (B, H)


if __name__ == "__main__":
    B, S, H = 2, 8, 32  # batch, max_seq_len, n_hidden

    key = jax.random.PRNGKey(0)
    k_x, k_w, k_m, k_x2, k_m2 = jax.random.split(key, 5)

    x = jax.random.normal(k_x, (B, S, H), dtype=jnp.float32)

    # Deterministic xavier_uniform_(weight, gain=0.02) for Linear(H, 1, bias=False)
    limit = 0.02 * (6.0 / (H + 1)) ** 0.5
    w_row = jax.random.uniform(k_w, (1, H), dtype=jnp.float32,
                               minval=-limit, maxval=limit)

    mask = (jax.random.uniform(k_m, (B, S)) > 0.25).astype(jnp.float32)

    # Masked path
    out = jax.block_until_ready(self_attention_layer2_forward(x, w_row, mask))
    ref = _reference(x, w_row, mask)
    assert out.shape == (B, H)
    assert jnp.allclose(out, ref, atol=1e-5, rtol=1e-5), "mismatch vs reference (mask)"

    # mask=None path (separate no-mask kernel, no ones() materialized)
    out_nm = jax.block_until_ready(self_attention_layer2_forward(x, w_row))
    ref_nm = _reference(x, w_row, None)
    assert jnp.allclose(out_nm, ref_nm, atol=1e-5, rtol=1e-5), "mismatch vs reference (no mask)"

    # Exercise the S-tiling / accumulator / padding path at small shapes by
    # forcing a tiny block budget (odd B and S, grid = (1, 2)).
    B2, S2, H2 = 3, 13, 32
    x2 = jax.random.normal(k_x2, (B2, S2, H2), dtype=jnp.float32)
    m2 = (jax.random.uniform(k_m2, (B2, S2)) > 0.5).astype(jnp.float32)
    out2 = jax.block_until_ready(
        self_attention_layer2_forward(x2, w_row, m2, block_elems=1024))
    ref2 = _reference(x2, w_row, m2)
    assert jnp.allclose(out2, ref2, atol=1e-5, rtol=1e-5), "mismatch vs reference (tiled)"

    print("KERNEL_OK")
</pallas_src>

<mosaic_0001>
module attributes {stable_mosaic.version = 11 : i64} {
  func.func @_attn_kernel_masked(%arg0: i32, %arg1: i32, %arg2: memref<2x8x32xf32, #tpu.memory_space<vmem>>, %arg3: memref<1x32xf32, #tpu.memory_space<vmem>>, %arg4: memref<2x8x1xf32, #tpu.memory_space<vmem>>, %arg5: memref<2x32xf32, #tpu.memory_space<vmem>>, %arg6: memref<2x32xf32, #tpu.memory_space<vmem>>) attributes {dimension_semantics = [#tpu.dimension_semantics<parallel>, #tpu.dimension_semantics<arbitrary>], iteration_bounds = array<i64: 1, 1>, scalar_prefetch = 0 : i64, scratch_operands = 1 : i64, tpu.core_type = #tpu.core_type<tc>, window_params = [{transform_indices = @transform_0, window_bounds = array<i64: 2, 8, 32>}, {pipeline_mode = #tpu.pipeline_mode<synchronous>, transform_indices = @transform_1, window_bounds = array<i64: 1, 32>}, {transform_indices = @transform_2, window_bounds = array<i64: 2, 8, 1>}, {transform_indices = @transform_3, window_bounds = array<i64: 2, 32>}]} {
    %c0 = arith.constant 0 : index
    %c0_0 = arith.constant 0 : index
    %c0_1 = arith.constant 0 : index
    %0 = vector.load %arg4[%c0, %c0_0, %c0_1] : memref<2x8x1xf32, #tpu.memory_space<vmem>>, vector<2x8x1xf32>
    %c0_i32 = arith.constant 0 : i32
    %1 = arith.cmpi eq, %arg1, %c0_i32 : i32
    %2 = arith.extui %1 : i1 to i32
    %c0_i32_2 = arith.constant 0 : i32
    %3 = arith.cmpi ne, %2, %c0_i32_2 : i32
    scf.if %3 {
      %cst_16 = arith.constant 0.000000e+00 : f32
      %26 = vector.broadcast %cst_16 : f32 to vector<2x32xf32>
      %c0_17 = arith.constant 0 : index
      %c0_18 = arith.constant 0 : index
      %27 = vector.load %arg6[%c0_17, %c0_18] : memref<2x32xf32, #tpu.memory_space<vmem>>, vector<2x32xf32>
      tpu.vector_store %arg6[%c0_17, %c0_18], %26 {strides = array<i32>} : memref<2x32xf32, #tpu.memory_space<vmem>>, vector<2x32xf32>,
    } else {
    }
    %c0_3 = arith.constant 0 : index
    %c0_4 = arith.constant 0 : index
    %c0_5 = arith.constant 0 : index
    %4 = vector.load %arg2[%c0_3, %c0_4, %c0_5] : memref<2x8x32xf32, #tpu.memory_space<vmem>>, vector<2x8x32xf32>
    %c0_6 = arith.constant 0 : index
    %c0_7 = arith.constant 0 : index
    %5 = vector.load %arg3[%c0_6, %c0_7] : memref<1x32xf32, #tpu.memory_space<vmem>>, vector<1x32xf32>
    %6 = vector.shape_cast %5 : vector<1x32xf32> to vector<1x1x32xf32>
    %7 = vector.broadcast %6 : vector<1x1x32xf32> to vector<2x8x32xf32>
    %8 = arith.mulf %4, %7 : vector<2x8x32xf32>
    %cst = arith.constant dense<0.000000e+00> : vector<2x8xf32>
    %9 = vector.multi_reduction <add>, %8, %cst [2] : vector<2x8x32xf32> to vector<2x8xf32>
    %10 = vector.shape_cast %9 : vector<2x8xf32> to vector<2x8x1xf32>
    %11 = arith.negf %10 : vector<2x8x1xf32>
    %12 = math.exp %11 : vector<2x8x1xf32>
    %cst_8 = arith.constant 1.000000e+00 : f32
    %13 = vector.broadcast %cst_8 : f32 to vector<2x8x1xf32>
    %14 = arith.addf %13, %12 : vector<2x8x1xf32>
    %15 = arith.divf %13, %14 : vector<2x8x1xf32>
    %16 = arith.mulf %15, %0 : vector<2x8x1xf32>
    %c0_9 = arith.constant 0 : index
    %c0_10 = arith.constant 0 : index
    %17 = vector.load %arg6[%c0_9, %c0_10] : memref<2x32xf32, #tpu.memory_space<vmem>>, vector<2x32xf32>
    %18 = vector.broadcast %16 : vector<2x8x1xf32> to vector<2x8x32xf32>
    %19 = arith.mulf %18, %4 : vector<2x8x32xf32>
    %cst_11 = arith.constant dense<0.000000e+00> : vector<2x32xf32>
    %20 = vector.multi_reduction <add>, %19, %cst_11 [1] : vector<2x8x32xf32> to vector<2x32xf32>
    %21 = arith.addf %17, %20 : vector<2x32xf32>
    %c0_12 = arith.constant 0 : index
    %c0_13 = arith.constant 0 : index
    %22 = vector.load %arg6[%c0_12, %c0_13] : memref<2x32xf32, #tpu.memory_space<vmem>>, vector<2x32xf32>
    tpu.vector_store %arg6[%c0_12, %c0_13], %21 {strides = array<i32>} : memref<2x32xf32, #tpu.memory_space<vmem>>, vector<2x32xf32>,
    %c0_i32_14 = arith.constant 0 : i32
    %23 = arith.cmpi eq, %arg1, %c0_i32_14 : i32
    %24 = arith.extui %23 : i1 to i32
    %c0_i32_15 = arith.constant 0 : i32
    %25 = arith.cmpi ne, %24, %c0_i32_15 : i32
    scf.if %25 {
      %c0_16 = arith.constant 0 : index
      %c0_17 = arith.constant 0 : index
      %26 = vector.load %arg6[%c0_16, %c0_17] : memref<2x32xf32, #tpu.memory_space<vmem>>, vector<2x32xf32>
      %c0_18 = arith.constant 0 : index
      %c0_19 = arith.constant 0 : index
      %27 = vector.load %arg5[%c0_18, %c0_19] : memref<2x32xf32, #tpu.memory_space<vmem>>, vector<2x32xf32>
      tpu.vector_store %arg5[%c0_18, %c0_19], %26 {strides = array<i32>} : memref<2x32xf32, #tpu.memory_space<vmem>>, vector<2x32xf32>,
    } else {
    }
    return
  }
  func.func @transform_0(%arg0: i32, %arg1: i32) -> (i32, i32, i32) {
    %c0_i32 = arith.constant 0 : i32
    %c0_i32_0 = arith.constant 0 : i32
    return %arg0, %arg1, %c0_i32 : i32, i32, i32
  }
  func.func @transform_1(%arg0: i32, %arg1: i32) -> (i32, i32) {
    %c0_i32 = arith.constant 0 : i32
    %c0_i32_0 = arith.constant 0 : i32
    %c0_i32_1 = arith.constant 0 : i32
    return %c0_i32, %c0_i32_0 : i32, i32
  }
  func.func @transform_2(%arg0: i32, %arg1: i32) -> (i32, i32, i32) {
    %c0_i32 = arith.constant 0 : i32
    %c0_i32_0 = arith.constant 0 : i32
    return %arg0, %arg1, %c0_i32 : i32, i32, i32
  }
  func.func @transform_3(%arg0: i32, %arg1: i32) -> (i32, i32) {
    %c0_i32 = arith.constant 0 : i32
    %c0_i32_0 = arith.constant 0 : i32
    return %arg0, %c0_i32 : i32, i32
  }
}

</mosaic_0001>

<llo_original>
// kernel: tpu_custom_call.1
$region0: #{tpu_custom_call.1}
  #allocation0 [shape = 'u32[]', space=smem, size = 0x4, offset = 0x4, fixed_abs, tag = 'smem constant byte address 0x4 - core index']
  #allocation1 [shape = 'u32[144,128]{1,0:T(1,128)}', space=vmem, size = 0x12000, scoped, tag = 'internal scratch']
  #allocation2 [shape = 'f32[2,32]{1,0:T(2,128)}', space=vmem, size = 0x400, scoped, tag = 'scratch operand']
  %s0 = inlined_call_operand.vmem [shape: f32[2,8,32], index: 0, kind: input, shape index: {}]
  %s1 = inlined_call_operand.vmem [shape: f32[1,32], index: 1, kind: input, shape index: {}]
  %s2 = inlined_call_operand.vmem [shape: f32[2,8,1], index: 2, kind: input, shape index: {}]
  %s3 = inlined_call_operand.hbm [shape: f32[2,32], index: 3, kind: output, shape index: {}]
  %s4 = sld [smem:[#allocation0]]
  $region30: #{tpu_custom_call.1} parent=0
    _
  %s6 = ssub.s32 1, %s4
  %s7 = scalar_select 0, %s6, %s4
  $region1: #{tpu_custom_call.1} parent=0
    #allocation3 [shape = 'u8[1024]{0}', space=vmem, size = 0x400, scoped, tag = 'output window, operand 0, single buffered']
    #allocation4 [shape = 's32[1]{0}', space=sflag, size = 0x4, scoped, tag = 'scoped memory for tpu_custom_call.1']
    %8 = vsyncpa [#allocation4], 0
    // Predicated region
    $region2: #{tpu_custom_call.1} parent=1 // pred_check
      _
    $region3: #{tpu_custom_call.1} parent=1 // pred_check_branch
      %10 = sbr.rel (0) target = $region5
    $region4: #{tpu_custom_call.1} parent=1 // pred_region
      _
    $region5: #{tpu_custom_call.1} parent=1 // pred_fallthru
      _
    // Predicated region
    $region6: #{tpu_custom_call.1} parent=1 // pred_check
      _
    $region7: #{tpu_custom_call.1} parent=1 // pred_check_branch
      %12 = sbr.rel (0) target = $region9
    $region8: #{tpu_custom_call.1} parent=1 // pred_region
      _
    $region9: #{tpu_custom_call.1} parent=1 // pred_fallthru
      _
    // Predicated region
    $region10: #{tpu_custom_call.1} parent=1 // pred_check
      _
    $region11: #{tpu_custom_call.1} parent=1 // pred_check_branch
      %14 = sbr.rel (0) target = $region13
    $region12: #{tpu_custom_call.1} parent=1 // pred_region
      _
    $region13: #{tpu_custom_call.1} parent=1 // pred_fallthru
      _
    %v15 = vld [vmem:[%s2] sm:$0xff]
    %v16 = vld [vmem:[%s2 + $0x8] sm:$0xff]
    %p17 = scmp.eq.s32.totalorder 0, 0
    // Predicated region
    $region14: #{tpu_custom_call.1} parent=1 // pred_check
      %p18 = pneg %p17
    $region15: #{tpu_custom_call.1} parent=1 // pred_check_branch
      %20 = sbr.rel (%p18) target = $region17
    $region16: #{tpu_custom_call.1} parent=1 // pred_region
      %vm21 = vcmask 254976
      %22 = vst.msk [vmem:[#allocation2] sm:$0x3] %vm21, 0.0
    $region17: #{tpu_custom_call.1} parent=1 // pred_fallthru
      _
    %v23 = vld [vmem:[%s0] sm:$0xff]
    %v24 = vld [vmem:[%s0 + $0x8] sm:$0xff]
    %v25 = vld [vmem:[%s1] sm:$0x1]
    %v27 = vlaneseq
    %v28 = vshrl.u32 %v27, 7
    %v29 = vsub.s32 0, %v28
    %v30 = vrot.slane %v25, %v29
    %v32 = vmul.f32 %v23, %v30
    %v33 = vmul.f32 %v24, %v30
    %vm34 = vcmask 261120
    %v35 = vsel %vm34, %v32, 0.0
    %36 = vadd.xlane.f32.xlu0 %v35
    %v37 = vpop.xlane.xlu0 %36
    %v38 = vsel %vm34, %v33, 0.0
    %39 = vadd.xlane.f32.xlu0 %v38
    %v40 = vpop.xlane.xlu0 %39
    %v41 = vxor.u32 %v37, 2147483648
    %v42 = vxor.u32 %v40, 2147483648
    %v43 = vmul.f32 %v41, 1.442695
    %v44 = vpow.pop %v43
    %v45 = vmul.f32 %v42, 1.442695
    %v46 = vpow.pop %v45
    %v47 = vadd.f32 %v44, 1.0
    %v48 = vadd.f32 %v46, 1.0
    %v49 = vrcp.pop %v47
    %v50 = vmul.f32 1.0, %v49
    %v51 = vrcp.pop %v48
    %v52 = vmul.f32 1.0, %v51
    %v53 = vmul.f32 %v50, %v15
    %v54 = vmul.f32 %v52, %v16
    %v55 = vld [vmem:[#allocation2] sm:$0x3]
    %57 = vset.pattern.permute.xlu0 0
    %58 = vperm.xlu0 %57, %v53
    %v59 = vpop.permute.xlu0 %58
    %62 = vset.pattern.permute.xlu0 0
    %63 = vperm.xlu0 %62, %v54
    %v64 = vpop.permute.xlu0 %63
    %v66 = vmul.f32 %v59, %v23
    %v67 = vmul.f32 %v64, %v24
    %v68 = vsel %vm34, %v66, 0.0
    %v69 = vrot.slane %v68, 4
    %v70 = vadd.f32 %v68, %v69
    %v71 = vrot.slane %v70, 2
    %v72 = vadd.f32 %v70, %v71
    %v73 = vrot.slane %v72, 1
    %v74 = vadd.f32 %v72, %v73
    %v75 = vsel %vm34, %v67, 0.0
    %v76 = vrot.slane %v75, 4
    %v77 = vadd.f32 %v75, %v76
    %v78 = vrot.slane %v77, 2
    %v79 = vadd.f32 %v77, %v78
    %v80 = vrot.slane %v79, 1
    %v81 = vadd.f32 %v79, %v80
    %vm84 = vcmask 1041409
    %v85 = vsel %vm84, %v81, %v74
    %v87 = vadd.f32 %v55, %v85
    %vm88 = vcmask 254976
    %89 = vst.msk [vmem:[#allocation2] sm:$0x3] %vm88, %v87
    // Predicated region
    $region18: #{tpu_custom_call.1} parent=1 // pred_check
      %p90 = pneg %p17
    $region19: #{tpu_custom_call.1} parent=1 // pred_check_branch
      %92 = sbr.rel (%p90) target = $region21
    $region20: #{tpu_custom_call.1} parent=1 // pred_region
      %v93 = vld [vmem:[#allocation2] sm:$0x3]
      %94 = vst.msk [vmem:[#allocation3] sm:$0x3] %vm88, %v93
    $region21: #{tpu_custom_call.1} parent=1 // pred_fallthru
      _
    // Predicated region
    $region22: #{tpu_custom_call.1} parent=1 // pred_check
      _
    $region23: #{tpu_custom_call.1} parent=1 // pred_check_branch
      %96 = sbr.rel (0) target = $region25
    $region24: #{tpu_custom_call.1} parent=1 // pred_region
      %s98 = ssub.s32 32, 32
      %99 = vsyncadd [#allocation4], %s98
      %s101 = sshll.u32 [#allocation3], 4
      %s102 = int_to_ptr.vmem [resolvable:$true] %s101
      %104 = dma.vmem_to_hbm [thread:$0]  %s102, 32, %s3, [#allocation4]
    $region25: #{tpu_custom_call.1} parent=1 // pred_fallthru
      _
    // Predicated region
    $region26: #{tpu_custom_call.1} parent=1 // pred_check
      _
    $region27: #{tpu_custom_call.1} parent=1 // pred_check_branch
      %106 = sbr.rel (0) target = $region29
    $region28: #{tpu_custom_call.1} parent=1 // pred_region
      %107 = dma.done [#allocation4], 32
    $region29: #{tpu_custom_call.1} parent=1 // pred_fallthru
      _
    %108 = vsyncpa [#allocation4], 1

</llo_original>
